<compile_context>
chip_gen: v7x
topology: tpu7x:2x2x1
jax: 0.10.0
libtpu: 0.0.40
codegen_flags: <defaults>
</compile_context>

<pallas_src>
import functools
import math

import jax
import jax.numpy as jnp
from jax import lax
from jax.experimental import pallas as pl
from jax.experimental.pallas import tpu as pltpu

_EPS = 1e-5
_MAX_GROUPS = 16          # cap on the lane-repack factor
_MAX_PACKED_LANES = 512   # keep repacked lane width modest


def _hw_budget():
    """Generation-aware (vmem_limit_bytes, f32_block_bytes, fused_max_elems)."""
    try:
        cap = int(pltpu.get_tpu_info().vmem_capacity_bytes)
    except Exception:  # not on TPU / interpret mode / API drift -> conservative
        cap = 0
    if cap >= (100 << 20):          # v5e / v6e: 128 MiB physical VMEM
        vmem_limit = 64 << 20
        blk_bytes = 4 << 20
    else:                            # v7x (64 MiB) or unknown: be conservative
        vmem_limit = 44 << 20
        blk_bytes = 3 << 20
    fused_max_elems = vmem_limit // 32   # f32 slab <= vmem_limit/8 -> ~7x headroom
    return vmem_limit, blk_bytes, fused_max_elems


def _pick_groups(d):
    """Lane-repack factor g: view (M, D) as (M/g, g*D) so the lane axis is 128-dense."""
    if d >= 128 or d % 128 == 0:
        return 1
    g = 128 // math.gcd(d, 128)
    if g > _MAX_GROUPS or g * d > _MAX_PACKED_LANES:
        return 1
    return g


def _finalize_gate(x, s1, s2, c0, c1, inv_m):
    """x: (R, C) f32; s1/s2: (1, C) per-feature sum / sumsq; c0/c1: (1, C) gate consts."""
    mean = s1 * inv_m
    var = jnp.maximum(s2 * inv_m - mean * mean, 0.0)      # biased var (training BN)
    inv_std = 1.0 / jnp.sqrt(var + _EPS)
    # p = sigmoid(y) = 0.5*(1+tanh(y/2));  out = x*(alpha + (1-alpha)*p)
    #                                          = x*(c0 + c1*tanh(y/2))
    t = jnp.tanh(x * (0.5 * inv_std) + (-0.5 * inv_std) * mean)
    return x * (c0 + c1 * t)


# ----------------------------- fused path (small / medium) -----------------------------

def _fused_kernel(x_ref, c_ref, o_ref, *, inv_m):
    x = x_ref[...].astype(jnp.float32)
    s1 = jnp.sum(x, axis=0, keepdims=True)
    s2 = jnp.sum(x * x, axis=0, keepdims=True)
    out = _finalize_gate(x, s1, s2, c_ref[0:1, :], c_ref[1:2, :], inv_m)
    o_ref[...] = out.astype(o_ref.dtype)


# ----------------------------- streaming path (large) -----------------------------

def _stats_kernel(x_ref, p_ref, *, tile_rows, valid_rows):
    """Per-tile sublane-partial sums: rows 0:8 = sum, rows 8:16 = sum of squares."""
    i = pl.program_id(0)
    x = x_ref[...].astype(jnp.float32)
    if valid_rows % tile_rows != 0:
        # Only the last tile overhangs the array; mask its garbage rows.
        row = i * tile_rows + lax.broadcasted_iota(jnp.int32, x.shape, 0)
        x = jnp.where(row < valid_rows, x, 0.0)
    tm, dp = x.shape
    xr = x.reshape(tm // 8, 8, dp)               # split sublane dim; layout-preserving
    p_ref[0:8, :] = jnp.sum(xr, axis=0)          # pure VPU adds, full-vreg stores
    p_ref[8:16, :] = jnp.sum(xr * xr, axis=0)


def _apply_kernel(x_ref, s_ref, c_ref, o_ref, *, inv_m):
    x = x_ref[...].astype(jnp.float32)
    out = _finalize_gate(x, s_ref[0:1, :], s_ref[1:2, :],
                         c_ref[0:1, :], c_ref[1:2, :], inv_m)
    o_ref[...] = out.astype(o_ref.dtype)


# ----------------------------- wrapper -----------------------------

def _dice_2d(x2d, alpha):
    m, d = x2d.shape
    out_dtype = x2d.dtype
    vmem_limit, blk_bytes, fused_max = _hw_budget()
    inv_m = 1.0 / float(m)

    # Gate constants: c0 = (1+alpha)/2, c1 = (1-alpha)/2.
    alpha_f = alpha.astype(jnp.float32)
    c2 = jnp.stack([(1.0 + alpha_f) * 0.5, (1.0 - alpha_f) * 0.5], axis=0)  # (2, d)

    # Fused, single-kernel path when the slab comfortably fits in VMEM.
    # (Shrink the threshold when D is not lane-aligned: those stores are masked,
    #  and the lane-dense streaming path becomes competitive sooner.)
    fmax = fused_max if d % 128 == 0 else max(fused_max // 4, 256 * 1024)
    if m * d <= fmax:
        return pl.pallas_call(
            functools.partial(_fused_kernel, inv_m=inv_m),
            out_shape=jax.ShapeDtypeStruct((m, d), out_dtype),
            grid=(1,),
            in_specs=[pl.BlockSpec((m, d), lambda i: (0, 0)),
                      pl.BlockSpec((2, d), lambda i: (0, 0))],
            out_specs=pl.BlockSpec((m, d), lambda i: (0, 0)),
            compiler_params=pltpu.CompilerParams(
                dimension_semantics=("arbitrary",),
                vmem_limit_bytes=vmem_limit),
        )(x2d, c2)

    # ---------- streaming two-pass path ----------
    g = _pick_groups(d)
    m_pad = ((m + g - 1) // g) * g
    xs = jnp.pad(x2d, ((0, m_pad - m), (0, 0))) if m_pad != m else x2d
    mp, dp = m_pad // g, g * d
    xp = xs.reshape(mp, dp)                       # lane-dense view (no data movement)
    c = jnp.tile(c2, (1, g)) if g > 1 else c2     # lane c -> feature c % d

    # Byte-based tile: ~blk_bytes of f32 per block, multiple of 8 sublanes.
    tm = max(8, (blk_bytes // (dp * 4)) // 8 * 8)
    tm = min(tm, ((mp + 7) // 8) * 8)
    nt = pl.cdiv(mp, tm)

    # Pass 1: per-tile partial stats (fully parallel -> both TCs on v7x).
    partials = pl.pallas_call(
        functools.partial(_stats_kernel, tile_rows=tm, valid_rows=mp),
        out_shape=jax.ShapeDtypeStruct((nt * 16, dp), jnp.float32),
        grid=(nt,),
        in_specs=[pl.BlockSpec((tm, dp), lambda i: (i, 0))],
        out_specs=pl.BlockSpec((16, dp), lambda i: (i, 0)),
        compiler_params=pltpu.CompilerParams(
            dimension_semantics=("parallel",),
            vmem_limit_bytes=vmem_limit),
    )(xp)

    # Tiny glue: reduce tile/sublane partials, fold the g lane-groups per feature.
    sums = partials.reshape(nt, 2, 8, dp).sum(axis=(0, 2))              # (2, dp) per-lane
    if g > 1:
        sums = jnp.tile(sums.reshape(2, g, d).sum(axis=1), (1, g))      # per-feature, re-tiled

    # Pass 2: elementwise apply; finalize recomputed per tile (negligible vs DMA).
    out = pl.pallas_call(
        functools.partial(_apply_kernel, inv_m=inv_m),
        out_shape=jax.ShapeDtypeStruct((mp, dp), out_dtype),
        grid=(nt,),
        in_specs=[pl.BlockSpec((tm, dp), lambda i: (i, 0)),
                  pl.BlockSpec((2, dp), lambda i: (0, 0)),
                  pl.BlockSpec((2, dp), lambda i: (0, 0))],
        out_specs=pl.BlockSpec((tm, dp), lambda i: (i, 0)),
        compiler_params=pltpu.CompilerParams(
            dimension_semantics=("parallel",),
            vmem_limit_bytes=vmem_limit),
    )(xp, sums, c)

    out = out.reshape(m_pad, d)
    return out[:m] if m_pad != m else out


def dice(x, alpha):
    """Dice activation. x: (N, D) or (N, L, D) (f32 or bf16); alpha: (D,)."""
    if x.ndim == 2:
        return _dice_2d(x, alpha)
    elif x.ndim == 3:
        b, l, d = x.shape
        return _dice_2d(x.reshape(b * l, d), alpha).reshape(b, l, d)
    else:
        raise NotImplementedError("Dice only supports 2-D or 3-D inputs")


def _dice_ref(x, alpha):
    # Pure-JAX reference matching PyTorch training-mode BatchNorm1d(affine=False).
    x = x.astype(jnp.float32)
    flat = x.reshape(-1, x.shape[-1])
    mean = jnp.mean(flat, axis=0, keepdims=True)
    var = jnp.mean((flat - mean) ** 2, axis=0, keepdims=True)
    y = (flat - mean) / jnp.sqrt(var + _EPS)
    p = jax.nn.sigmoid(y)
    out = alpha[None, :] * (1.0 - p) * flat + p * flat
    return out.reshape(x.shape)


if __name__ == "__main__":
    key = jax.random.PRNGKey(0)
    k1, k2, k3, k4, k5, k6 = jax.random.split(key, 6)

    dim = 32
    alpha = jnp.full((dim,), 0.25, dtype=jnp.float32)

    # 3-D fused path: (batch=2, seq=8, dim=32)
    x3 = jax.random.normal(k1, (2, 8, dim), dtype=jnp.float32)
    out3 = jax.block_until_ready(dice(x3, alpha))
    assert out3.shape == x3.shape and out3.dtype == x3.dtype
    assert jnp.max(jnp.abs(out3 - _dice_ref(x3, alpha))) < 5e-3

    # 2-D fused path: (batch=16, dim=32)
    x2 = jax.random.normal(k2, (16, dim), dtype=jnp.float32)
    out2 = jax.block_until_ready(dice(x2, alpha))
    assert out2.shape == x2.shape
    assert jnp.max(jnp.abs(out2 - _dice_ref(x2, alpha))) < 5e-3

    # bf16 HBM in/out, f32 math in-kernel
    xb = jax.random.normal(k3, (2, 8, dim), dtype=jnp.float32).astype(jnp.bfloat16)
    outb = jax.block_until_ready(dice(xb, alpha))
    assert outb.dtype == jnp.bfloat16
    assert jnp.max(jnp.abs(outb.astype(jnp.float32) - _dice_ref(xb, alpha))) < 6e-2

    # awkward (non-8/128-aligned) fused shape: (300, 48)
    dim48 = 48
    a48 = jnp.linspace(-0.5, 0.5, dim48, dtype=jnp.float32)
    x48 = jax.random.normal(k4, (300, dim48), dtype=jnp.float32)
    out48 = jax.block_until_ready(dice(x48, a48))
    assert jnp.max(jnp.abs(out48 - _dice_ref(x48, a48))) < 5e-3

    # streaming two-pass path, lane-repacked (D=32 -> Dp=128), ragged last tile
    xs_big = jax.random.normal(k5, (130048, dim), dtype=jnp.float32)
    outs = jax.block_until_ready(dice(xs_big, alpha))
    assert outs.shape == xs_big.shape
    assert jnp.max(jnp.abs(outs - _dice_ref(xs_big, alpha))) < 5e-3

    # streaming two-pass path, D already lane-aligned, bf16 HBM traffic
    dim128 = 128
    a128 = jnp.full((dim128,), -0.1, dtype=jnp.float32)
    xl = jax.random.normal(k6, (32768, dim128), dtype=jnp.float32).astype(jnp.bfloat16)
    outl = jax.block_until_ready(dice(xl, a128))
    assert outl.dtype == jnp.bfloat16
    assert jnp.max(jnp.abs(outl.astype(jnp.float32) - _dice_ref(xl, a128))) < 6e-2

    print("KERNEL_OK")
</pallas_src>

<mosaic_0001>
module attributes {stable_mosaic.version = 11 : i64} {
  func.func @_fused_kernel(%arg0: i32, %arg1: memref<16x32xf32, #tpu.memory_space<vmem>>, %arg2: memref<2x32xf32, #tpu.memory_space<vmem>>, %arg3: memref<16x32xf32, #tpu.memory_space<vmem>>) attributes {dimension_semantics = [#tpu.dimension_semantics<arbitrary>], iteration_bounds = array<i64: 1>, scalar_prefetch = 0 : i64, scratch_operands = 0 : i64, tpu.core_type = #tpu.core_type<tc>, window_params = [{pipeline_mode = #tpu.pipeline_mode<synchronous>, transform_indices = @transform_0, window_bounds = array<i64: 16, 32>}, {pipeline_mode = #tpu.pipeline_mode<synchronous>, transform_indices = @transform_1, window_bounds = array<i64: 2, 32>}, {pipeline_mode = #tpu.pipeline_mode<synchronous>, transform_indices = @transform_2, window_bounds = array<i64: 16, 32>}]} {
    %c0 = arith.constant 0 : index
    %c0_0 = arith.constant 0 : index
    %0 = vector.load %arg1[%c0, %c0_0] : memref<16x32xf32, #tpu.memory_space<vmem>>, vector<16x32xf32>
    %cst = arith.constant dense<0.000000e+00> : vector<32xf32>
    %1 = vector.multi_reduction <add>, %0, %cst [0] : vector<16x32xf32> to vector<32xf32>
    %2 = vector.shape_cast %1 : vector<32xf32> to vector<1x32xf32>
    %3 = arith.mulf %0, %0 : vector<16x32xf32>
    %cst_1 = arith.constant dense<0.000000e+00> : vector<32xf32>
    %4 = vector.multi_reduction <add>, %3, %cst_1 [0] : vector<16x32xf32> to vector<32xf32>
    %5 = vector.shape_cast %4 : vector<32xf32> to vector<1x32xf32>
    %c0_2 = arith.constant 0 : index
    %c0_3 = arith.constant 0 : index
    %6 = vector.load %arg2[%c0_2, %c0_3] : memref<2x32xf32, #tpu.memory_space<vmem>>, vector<1x32xf32>
    %c1 = arith.constant 1 : index
    %c0_4 = arith.constant 0 : index
    %7 = vector.load %arg2[%c1, %c0_4] : memref<2x32xf32, #tpu.memory_space<vmem>>, vector<1x32xf32>
    %cst_5 = arith.constant 6.250000e-02 : f32
    %8 = vector.broadcast %cst_5 : f32 to vector<1x32xf32>
    %9 = arith.mulf %2, %8 : vector<1x32xf32>
    %cst_6 = arith.constant 6.250000e-02 : f32
    %10 = vector.broadcast %cst_6 : f32 to vector<1x32xf32>
    %11 = arith.mulf %5, %10 : vector<1x32xf32>
    %12 = arith.mulf %9, %9 : vector<1x32xf32>
    %13 = arith.subf %11, %12 : vector<1x32xf32>
    %cst_7 = arith.constant 0.000000e+00 : f32
    %14 = vector.broadcast %cst_7 : f32 to vector<1x32xf32>
    %15 = arith.maximumf %13, %14 : vector<1x32xf32>
    %cst_8 = arith.constant 9.99999974E-6 : f32
    %16 = vector.broadcast %cst_8 : f32 to vector<1x32xf32>
    %17 = arith.addf %15, %16 : vector<1x32xf32>
    %18 = math.sqrt %17 : vector<1x32xf32>
    %cst_9 = arith.constant 1.000000e+00 : f32
    %19 = vector.broadcast %cst_9 : f32 to vector<1x32xf32>
    %20 = arith.divf %19, %18 : vector<1x32xf32>
    %cst_10 = arith.constant 5.000000e-01 : f32
    %21 = vector.broadcast %cst_10 : f32 to vector<1x32xf32>
    %22 = arith.mulf %21, %20 : vector<1x32xf32>
    %23 = vector.broadcast %22 : vector<1x32xf32> to vector<16x32xf32>
    %24 = arith.mulf %0, %23 : vector<16x32xf32>
    %cst_11 = arith.constant -5.000000e-01 : f32
    %25 = vector.broadcast %cst_11 : f32 to vector<1x32xf32>
    %26 = arith.mulf %25, %20 : vector<1x32xf32>
    %27 = arith.mulf %26, %9 : vector<1x32xf32>
    %28 = vector.broadcast %27 : vector<1x32xf32> to vector<16x32xf32>
    %29 = arith.addf %24, %28 : vector<16x32xf32>
    %30 = math.tanh %29 : vector<16x32xf32>
    %31 = vector.broadcast %7 : vector<1x32xf32> to vector<16x32xf32>
    %32 = arith.mulf %31, %30 : vector<16x32xf32>
    %33 = vector.broadcast %6 : vector<1x32xf32> to vector<16x32xf32>
    %34 = arith.addf %33, %32 : vector<16x32xf32>
    %35 = arith.mulf %0, %34 : vector<16x32xf32>
    %c0_12 = arith.constant 0 : index
    %c0_13 = arith.constant 0 : index
    %36 = vector.load %arg3[%c0_12, %c0_13] : memref<16x32xf32, #tpu.memory_space<vmem>>, vector<16x32xf32>
    tpu.vector_store %arg3[%c0_12, %c0_13], %35 {strides = array<i32>} : memref<16x32xf32, #tpu.memory_space<vmem>>, vector<16x32xf32>,
    return
  }
  func.func @transform_0(%arg0: i32) -> (i32, i32) {
    %c0_i32 = arith.constant 0 : i32
    %c0_i32_0 = arith.constant 0 : i32
    %c0_i32_1 = arith.constant 0 : i32
    return %c0_i32, %c0_i32_0 : i32, i32
  }
  func.func @transform_1(%arg0: i32) -> (i32, i32) {
    %c0_i32 = arith.constant 0 : i32
    %c0_i32_0 = arith.constant 0 : i32
    %c0_i32_1 = arith.constant 0 : i32
    return %c0_i32, %c0_i32_0 : i32, i32
  }
  func.func @transform_2(%arg0: i32) -> (i32, i32) {
    %c0_i32 = arith.constant 0 : i32
    %c0_i32_0 = arith.constant 0 : i32
    %c0_i32_1 = arith.constant 0 : i32
    return %c0_i32, %c0_i32_0 : i32, i32
  }
}

</mosaic_0001>

<llo_original>
// kernel: tpu_custom_call.1
$region0: #{tpu_custom_call.1}
  #allocation0 [shape = 'u32[]', space=smem, size = 0x4, offset = 0x4, fixed_abs, tag = 'smem constant byte address 0x4 - core index']
  #allocation1 [shape = 'u32[144,128]{1,0:T(1,128)}', space=vmem, size = 0x12000, scoped, tag = 'internal scratch']
  %s0 = inlined_call_operand.hbm [shape: f32[16,32], index: 0, kind: input, shape index: {}]
  %s1 = inlined_call_operand.vmem [shape: f32[2,32], index: 1, kind: input, shape index: {}]
  %s2 = inlined_call_operand.hbm [shape: f32[16,32], index: 2, kind: output, shape index: {}]
  %s3 = sld [smem:[#allocation0]]
  $region22: #{tpu_custom_call.1} parent=0
    _
  %s5 = ssub.s32 1, %s3
  %s6 = scalar_select 0, %s5, %s3
  $region1: #{tpu_custom_call.1} parent=0
    #allocation2 [shape = 'u8[8192]{0}', space=vmem, size = 0x2000, scoped, tag = 'input window, operand 0, single buffered']
    #allocation3 [shape = 's32[1]{0}', space=sflag, size = 0x4, scoped, tag = 'scoped memory for tpu_custom_call.1']
    #allocation4 [shape = 's32[1]{0}', space=sflag, size = 0x4, scoped, tag = 'scoped memory for tpu_custom_call.1']
    #allocation5 [shape = 'u8[8192]{0}', space=vmem, size = 0x2000, scoped, tag = 'output window, operand 0, single buffered']
    %7 = vsyncpa [#allocation3], 0
    %8 = vsyncpa [#allocation4], 0
    // Predicated region
    $region2: #{tpu_custom_call.1} parent=1 // pred_check
      _
    $region3: #{tpu_custom_call.1} parent=1 // pred_check_branch
      %10 = sbr.rel (0) target = $region5
    $region4: #{tpu_custom_call.1} parent=1 // pred_region
      %s12 = ssub.s32 256, 256
      %13 = vsyncadd [#allocation3], %s12
      %s14 = sshll.u32 [#allocation2], 4
      %s15 = int_to_ptr.vmem [resolvable:$true] %s14
      %20 = dma.hbm_to_vmem [thread:$0]  %s0, 256, %s15, [#allocation3], 128, 128, 8
    $region5: #{tpu_custom_call.1} parent=1 // pred_fallthru
      _
    // Predicated region
    $region6: #{tpu_custom_call.1} parent=1 // pred_check
      _
    $region7: #{tpu_custom_call.1} parent=1 // pred_check_branch
      %22 = sbr.rel (0) target = $region9
    $region8: #{tpu_custom_call.1} parent=1 // pred_region
      _
    $region9: #{tpu_custom_call.1} parent=1 // pred_fallthru
      _
    // Predicated region
    $region10: #{tpu_custom_call.1} parent=1 // pred_check
      _
    $region11: #{tpu_custom_call.1} parent=1 // pred_check_branch
      %24 = sbr.rel (0) target = $region13
    $region12: #{tpu_custom_call.1} parent=1 // pred_region
      %25 = dma.done [#allocation3], 256
    $region13: #{tpu_custom_call.1} parent=1 // pred_fallthru
      _
    %v26 = vld [vmem:[#allocation2] sm:$0xff]
    %v27 = vld [vmem:[#allocation2 + $0x8] sm:$0xff]
    %vm28 = vcmask 261120
    %v29 = vsel %vm28, %v26, 0.0
    %v30 = vsel %vm28, %v27, 0.0
    %v31 = vadd.f32 %v29, %v30
    %v32 = vrot.slane %v31, 4
    %v33 = vadd.f32 %v31, %v32
    %v34 = vrot.slane %v33, 2
    %v35 = vadd.f32 %v33, %v34
    %v36 = vrot.slane %v35, 1
    %v37 = vadd.f32 %v35, %v36
    %v38 = vmul.f32 %v26, %v26
    %v39 = vmul.f32 %v27, %v27
    %v40 = vsel %vm28, %v38, 0.0
    %v41 = vsel %vm28, %v39, 0.0
    %v42 = vadd.f32 %v40, %v41
    %v43 = vrot.slane %v42, 4
    %v44 = vadd.f32 %v42, %v43
    %v45 = vrot.slane %v44, 2
    %v46 = vadd.f32 %v44, %v45
    %v47 = vrot.slane %v46, 1
    %v48 = vadd.f32 %v46, %v47
    %v49 = vld [vmem:[%s1] sm:$0x1]
    %v50 = vld [vmem:[%s1 + $0x1] sm:$0x1]
    %v51 = vmul.f32 %v37, 0.0625
    %v52 = vmul.f32 %v48, 0.0625
    %v53 = vmul.f32 %v51, %v51
    %v54 = vsub.f32 %v52, %v53
    %v55 = vmax.f32 %v54, 0.0
    %v56 = vadd.f32 %v55, 1e-05
    %v57 = vrsqrt.pop %v56
    %v58 = vmul.f32 %v56, %v57
    %vm59 = vcmp.eq.f32.partialorder %v56, inf
    %v60 = vsel %vm59, %v56, %v58
    %vm61 = vcmp.eq.f32.partialorder %v56, 0.0
    %v62 = vand.u32 %v56, 2147483648
    %v63 = vsel %vm61, %v62, %v60
    %v64 = vrcp.pop %v63
    %v65 = vmul.f32 1.0, %v64
    %v66 = vmul.f32 %v65, 0.5
    %v67 = vmul.f32 %v26, %v66
    %v68 = vmul.f32 %v27, %v66
    %v69 = vmul.f32 %v65, -0.5
    %v70 = vmul.f32 %v69, %v51
    %v71 = vadd.f32 %v67, %v70
    %v72 = vadd.f32 %v68, %v70
    %v73 = vtanh.pop %v71
    %v74 = vtanh.pop %v72
    %v75 = vlaneseq
    %v76 = vshrl.u32 %v75, 7
    %v77 = vsub.s32 0, %v76
    %v78 = vrot.slane %v50, %v77
    %v79 = vmul.f32 %v78, %v73
    %v80 = vmul.f32 %v78, %v74
    %v81 = vlaneseq
    %v82 = vshrl.u32 %v81, 7
    %v83 = vsub.s32 0, %v82
    %v84 = vrot.slane %v49, %v83
    %v85 = vadd.f32 %v84, %v79
    %v86 = vadd.f32 %v84, %v80
    %v87 = vmul.f32 %v26, %v85
    %v88 = vmul.f32 %v27, %v86
    %89 = vst.msk [vmem:[#allocation5] sm:$0xff] %vm28, %v87
    %90 = vst.msk [vmem:[#allocation5 + $0x8] sm:$0xff] %vm28, %v88
    // Predicated region
    $region14: #{tpu_custom_call.1} parent=1 // pred_check
      _
    $region15: #{tpu_custom_call.1} parent=1 // pred_check_branch
      %92 = sbr.rel (0) target = $region17
    $region16: #{tpu_custom_call.1} parent=1 // pred_region
      %s94 = ssub.s32 256, 256
      %95 = vsyncadd [#allocation4], %s94
      %s96 = sshll.u32 [#allocation5], 4
      %s97 = int_to_ptr.vmem [resolvable:$true] %s96
      %102 = dma.vmem_to_hbm [thread:$0]  %s97, 256, %s2, [#allocation4], 128, 128, 8
    $region17: #{tpu_custom_call.1} parent=1 // pred_fallthru
      _
    // Predicated region
    $region18: #{tpu_custom_call.1} parent=1 // pred_check
      _
    $region19: #{tpu_custom_call.1} parent=1 // pred_check_branch
      %104 = sbr.rel (0) target = $region21
    $region20: #{tpu_custom_call.1} parent=1 // pred_region
      %105 = dma.done [#allocation4], 256
    $region21: #{tpu_custom_call.1} parent=1 // pred_fallthru
      _
    %106 = vsyncpa [#allocation3], 1
    %107 = vsyncpa [#allocation4], 1

</llo_original>
